<compile_context>
chip_gen: v5e
topology: v5e:2x2
jax: 0.10.0
libtpu: 0.0.40
codegen_flags: <defaults>
</compile_context>

<pallas_src>
import jax
import jax.numpy as jnp
from jax.experimental import pallas as pl
from jax.experimental.pallas import tpu as pltpu


def bent_kernel(x_ref, alpha_ref, beta_ref, bias_ref, o_ref):
    # x: (tb, tc) tile; params: (1, tc) rows broadcast across sublanes.
    x = x_ref[...] + bias_ref[...]
    # Single select: identical semantics to the mask-multiply form (x==0 -> 0
    # via the alpha path, NaN propagates), 1 cmp + 1 vselect + 1 vmul / elem.
    scale = jnp.where(x >= 0, alpha_ref[...], beta_ref[...])
    o_ref[...] = x * scale


def _round8_down(n):
    return (n // 8) * 8


def _device_profile():
    """Generation-aware tiling budget (bytes of x per block), minimum grid
    programs along the parallel batch axis, and scoped-VMEM limit to request."""
    kind = ""
    try:
        kind = jax.devices()[0].device_kind.lower()
    except Exception:
        pass
    if "v7" in kind:
        # 3.2 TB/s HBM wants big steps; only 64 MiB physical VMEM; 2 TCs.
        return dict(tile_bytes=8 << 20, min_programs=4, vmem_limit=48 << 20)
    if "v6" in kind:
        # Single TC, 128 MiB VMEM; ~16 MiB double-buffered footprint.
        return dict(tile_bytes=4 << 20, min_programs=1, vmem_limit=64 << 20)
    if "v5" in kind:
        # 16 MiB default scoped limit, ~0.82 TB/s HBM: 2 MiB tiles already
        # sit at ~94% of roofline.
        return dict(tile_bytes=2 << 20, min_programs=1, vmem_limit=32 << 20)
    # Unknown generation: conservative footprint, allow 2-way core sharding.
    return dict(tile_bytes=2 << 20, min_programs=2, vmem_limit=32 << 20)


def _pick_tiles(B, C, itemsize, prof):
    """Pick (tb, tc): lane-dense channel tile + byte-budgeted, 8-aligned batch
    tile, with a >=min_programs grid guarantee for multi-TC chips."""
    # Channel tile: multiple of 128 (unmasked stores) and bounded so wide C
    # does not force tiny batch tiles or blow the VMEM budget. Ragged C uses
    # the full extent (always a legal block).
    TC_MAX = 2048
    if C % 128 == 0 and C > TC_MAX:
        tc = TC_MAX
    else:
        tc = C

    if B <= 8:
        # Full-extent batch block (legal for any B); nothing to tile.
        return B, tc

    # Batch tile from the byte budget (amortize ~0.35 us per grid step).
    rows = prof["tile_bytes"] // max(1, tc * itemsize)
    tb = max(8, _round8_down(rows))
    tb = min(tb, max(8, _round8_down(B)))  # partial last block handles ragged B

    # Guarantee >= min_programs grid steps along batch (v7x megacore sharding).
    if prof["min_programs"] > 1:
        target = _round8_down(pl.cdiv(B, prof["min_programs"]))
        if target >= 8:
            tb = min(tb, target)
    return tb, tc


def bent_forward(x, alphas, betas, bias, *, tb=None, tc=None):
    """Pallas implementation of Bent.forward.

    x:       (B, C) float32
    alphas:  (C,)   float32
    betas:   (C,)   float32
    bias:    (C,)   float32
    """
    B, C = x.shape
    itemsize = jnp.dtype(x.dtype).itemsize
    prof = _device_profile()
    auto_tb, auto_tc = _pick_tiles(B, C, itemsize, prof)
    if tb is None:
        tb = auto_tb
    if tc is None:
        tc = auto_tc

    alphas2 = alphas.reshape(1, C)
    betas2 = betas.reshape(1, C)
    bias2 = bias.reshape(1, C)

    cost = pl.CostEstimate(
        flops=4 * B * C,  # add + cmp + select + mul per element
        transcendentals=0,
        bytes_accessed=2 * B * C * itemsize + 3 * C * itemsize,
    )

    grid = (pl.cdiv(B, tb), pl.cdiv(C, tc))
    return pl.pallas_call(
        bent_kernel,
        out_shape=jax.ShapeDtypeStruct((B, C), x.dtype),
        grid_spec=pltpu.PrefetchScalarGridSpec(
            num_scalar_prefetch=0,
            grid=grid,
            in_specs=[
                pl.BlockSpec((tb, tc), lambda i, j: (i, j)),   # x tile
                pl.BlockSpec((1, tc), lambda i, j: (0, j)),    # alphas (resident over batch)
                pl.BlockSpec((1, tc), lambda i, j: (0, j)),    # betas
                pl.BlockSpec((1, tc), lambda i, j: (0, j)),    # bias
            ],
            out_specs=pl.BlockSpec((tb, tc), lambda i, j: (i, j)),
        ),
        compiler_params=pltpu.CompilerParams(
            dimension_semantics=("parallel", "parallel"),
            vmem_limit_bytes=prof["vmem_limit"],
        ),
        cost_estimate=cost,
    )(x, alphas2, betas2, bias2)


if __name__ == "__main__":
    # hparams consistent with the module: channels=C, batch_size=B.
    B, C = 8, 128

    key = jax.random.PRNGKey(0)
    kx, ka, kb, kc = jax.random.split(key, 4)

    # make_normal_batch: standard multivariate normal samples of shape (B, C).
    x = jax.random.normal(kx, (B, C), dtype=jnp.float32)

    # Module __init__ gives alphas=ones, betas=ones, bias=zeros; perturb
    # deterministically so the kernel's branching compute is exercised.
    alphas = jnp.ones((C,), jnp.float32) + 0.1 * jax.random.normal(ka, (C,), jnp.float32)
    betas = jnp.ones((C,), jnp.float32) + 0.1 * jax.random.normal(kb, (C,), jnp.float32)
    bias = jnp.zeros((C,), jnp.float32) + 0.1 * jax.random.normal(kc, (C,), jnp.float32)

    y = bent_forward(x, alphas, betas, bias)
    y = jax.block_until_ready(y)

    # Pure-JAX reference of the PyTorch forward semantics.
    xb = x + bias[None, :]
    y_ref = xb * (xb >= 0).astype(jnp.float32) * alphas[None, :] \
          + xb * (xb < 0).astype(jnp.float32) * betas[None, :]

    assert y.shape == (B, C) and y.dtype == jnp.float32
    assert jnp.allclose(y, y_ref, atol=1e-6, rtol=1e-6)
    print("KERNEL_OK")
</pallas_src>

<mosaic_0001>
module attributes {stable_mosaic.version = 11 : i64} {
  func.func @bent_kernel(%arg0: i32, %arg1: i32, %arg2: memref<8x128xf32, #tpu.memory_space<vmem>>, %arg3: memref<1x128xf32, #tpu.memory_space<vmem>>, %arg4: memref<1x128xf32, #tpu.memory_space<vmem>>, %arg5: memref<1x128xf32, #tpu.memory_space<vmem>>, %arg6: memref<8x128xf32, #tpu.memory_space<vmem>>) attributes {dimension_semantics = [#tpu.dimension_semantics<parallel>, #tpu.dimension_semantics<parallel>], iteration_bounds = array<i64: 1, 1>, scalar_prefetch = 0 : i64, scratch_operands = 0 : i64, tpu.core_type = #tpu.core_type<tc>, window_params = [{transform_indices = @transform_0, window_bounds = array<i64: 8, 128>}, {transform_indices = @transform_1, window_bounds = array<i64: 1, 128>}, {transform_indices = @transform_2, window_bounds = array<i64: 1, 128>}, {transform_indices = @transform_3, window_bounds = array<i64: 1, 128>}, {transform_indices = @transform_4, window_bounds = array<i64: 8, 128>}]} {
    %c0 = arith.constant 0 : index
    %c0_0 = arith.constant 0 : index
    %0 = vector.load %arg2[%c0, %c0_0] : memref<8x128xf32, #tpu.memory_space<vmem>>, vector<8x128xf32>
    %c0_1 = arith.constant 0 : index
    %c0_2 = arith.constant 0 : index
    %1 = vector.load %arg5[%c0_1, %c0_2] : memref<1x128xf32, #tpu.memory_space<vmem>>, vector<1x128xf32>
    %2 = vector.broadcast %1 : vector<1x128xf32> to vector<8x128xf32>
    %3 = arith.addf %0, %2 : vector<8x128xf32>
    %cst = arith.constant 0.000000e+00 : f32
    %4 = vector.broadcast %cst : f32 to vector<8x128xf32>
    %5 = arith.cmpf oge, %3, %4 : vector<8x128xf32>
    %c0_3 = arith.constant 0 : index
    %c0_4 = arith.constant 0 : index
    %6 = vector.load %arg3[%c0_3, %c0_4] : memref<1x128xf32, #tpu.memory_space<vmem>>, vector<1x128xf32>
    %c0_5 = arith.constant 0 : index
    %c0_6 = arith.constant 0 : index
    %7 = vector.load %arg4[%c0_5, %c0_6] : memref<1x128xf32, #tpu.memory_space<vmem>>, vector<1x128xf32>
    %8 = vector.shape_cast %6 : vector<1x128xf32> to vector<1x128xf32>
    %9 = vector.broadcast %8 : vector<1x128xf32> to vector<8x128xf32>
    %10 = vector.shape_cast %7 : vector<1x128xf32> to vector<1x128xf32>
    %11 = vector.broadcast %10 : vector<1x128xf32> to vector<8x128xf32>
    %12 = arith.select %5, %9, %11 : vector<8x128xi1>, vector<8x128xf32>
    %13 = arith.mulf %3, %12 : vector<8x128xf32>
    %c0_7 = arith.constant 0 : index
    %c0_8 = arith.constant 0 : index
    %14 = vector.load %arg6[%c0_7, %c0_8] : memref<8x128xf32, #tpu.memory_space<vmem>>, vector<8x128xf32>
    tpu.vector_store %arg6[%c0_7, %c0_8], %13 {strides = array<i32>} : memref<8x128xf32, #tpu.memory_space<vmem>>, vector<8x128xf32>,
    return
  }
  func.func @transform_0(%arg0: i32, %arg1: i32) -> (i32, i32) {
    %c0_i32 = arith.constant 0 : i32
    return %arg0, %arg1 : i32, i32
  }
  func.func @transform_1(%arg0: i32, %arg1: i32) -> (i32, i32) {
    %c0_i32 = arith.constant 0 : i32
    %c0_i32_0 = arith.constant 0 : i32
    return %c0_i32, %arg1 : i32, i32
  }
  func.func @transform_2(%arg0: i32, %arg1: i32) -> (i32, i32) {
    %c0_i32 = arith.constant 0 : i32
    %c0_i32_0 = arith.constant 0 : i32
    return %c0_i32, %arg1 : i32, i32
  }
  func.func @transform_3(%arg0: i32, %arg1: i32) -> (i32, i32) {
    %c0_i32 = arith.constant 0 : i32
    %c0_i32_0 = arith.constant 0 : i32
    return %c0_i32, %arg1 : i32, i32
  }
  func.func @transform_4(%arg0: i32, %arg1: i32) -> (i32, i32) {
    %c0_i32 = arith.constant 0 : i32
    return %arg0, %arg1 : i32, i32
  }
}

</mosaic_0001>

<llo_original>
// kernel: tpu_custom_call.1
$region0: #{tpu_custom_call.1}
  #allocation0 [shape = 'u32[]', space=smem, size = 0x4, offset = 0x4, fixed_abs, tag = 'smem constant byte address 0x4 - core index']
  #allocation1 [shape = 'u32[72,128]{1,0:T(1,128)}', space=vmem, size = 0x9000, scoped, tag = 'internal scratch']
  %s0 = inlined_call_operand.hbm [shape: f32[8,128], index: 0, kind: input, shape index: {}]
  %s1 = inlined_call_operand.hbm [shape: f32[1,128], index: 1, kind: input, shape index: {}]
  %s2 = inlined_call_operand.vmem [shape: f32[1,128], index: 2, kind: input, shape index: {}]
  %s3 = inlined_call_operand.vmem [shape: f32[1,128], index: 3, kind: input, shape index: {}]
  %s4 = inlined_call_operand.hbm [shape: f32[8,128], index: 4, kind: output, shape index: {}]
  %s5 = sld [smem:[#allocation0]]
  $region34: #{tpu_custom_call.1} parent=0
    _
  %s7 = ssub.s32 1, %s5
  %s8 = scalar_select 0, %s7, %s5
  $region1: #{tpu_custom_call.1} parent=0
    #allocation2 [shape = 'u8[4096]{0}', space=vmem, size = 0x1000, scoped, tag = 'input window, operand 0, single buffered']
    #allocation3 [shape = 's32[1]{0}', space=sflag, size = 0x4, scoped, tag = 'scoped memory for tpu_custom_call.1']
    #allocation4 [shape = 's32[1]{0}', space=sflag, size = 0x4, scoped, tag = 'scoped memory for tpu_custom_call.1']
    #allocation5 [shape = 'u8[512]{0}', space=vmem, size = 0x400, scoped, tag = 'input window, operand 1, single buffered']
    #allocation6 [shape = 's32[1]{0}', space=sflag, size = 0x4, scoped, tag = 'scoped memory for tpu_custom_call.1']
    #allocation7 [shape = 'u8[4096]{0}', space=vmem, size = 0x1000, scoped, tag = 'output window, operand 0, single buffered']
    %9 = vsyncpa [#allocation3], 0
    %10 = vsyncpa [#allocation6], 0
    %11 = vsyncpa [#allocation4], 0
    // Predicated region
    $region2: #{tpu_custom_call.1} parent=1 // pred_check
      _
    $region3: #{tpu_custom_call.1} parent=1 // pred_check_branch
      %13 = sbr.rel (0) target = $region5
    $region4: #{tpu_custom_call.1} parent=1 // pred_region
      %15 = vsyncadd [#allocation3], 0
      %s17 = sshll.u32 %s0, 4
      %s18 = int_to_ptr.hbm [resolvable:$true] %s17
      %s19 = sshll.u32 [#allocation2], 4
      %s20 = int_to_ptr.vmem [resolvable:$true] %s19
      %22 = dma.hbm_to_vmem [thread:$0]  %s18, 128, %s20, [#allocation3]
    $region5: #{tpu_custom_call.1} parent=1 // pred_fallthru
      _
    // Predicated region
    $region6: #{tpu_custom_call.1} parent=1 // pred_check
      _
    $region7: #{tpu_custom_call.1} parent=1 // pred_check_branch
      %24 = sbr.rel (0) target = $region9
    $region8: #{tpu_custom_call.1} parent=1 // pred_region
      %26 = vsyncadd [#allocation6], 0
      %s28 = sshll.u32 %s1, 4
      %s29 = int_to_ptr.hbm [resolvable:$true] %s28
      %s30 = sshll.u32 [#allocation5], 4
      %s31 = int_to_ptr.vmem [resolvable:$true] %s30
      %33 = dma.hbm_to_vmem [thread:$0]  %s29, 16, %s31, [#allocation6]
    $region9: #{tpu_custom_call.1} parent=1 // pred_fallthru
      _
    // Predicated region
    $region10: #{tpu_custom_call.1} parent=1 // pred_check
      _
    $region11: #{tpu_custom_call.1} parent=1 // pred_check_branch
      %35 = sbr.rel (0) target = $region13
    $region12: #{tpu_custom_call.1} parent=1 // pred_region
      _
    $region13: #{tpu_custom_call.1} parent=1 // pred_fallthru
      _
    // Predicated region
    $region14: #{tpu_custom_call.1} parent=1 // pred_check
      _
    $region15: #{tpu_custom_call.1} parent=1 // pred_check_branch
      %37 = sbr.rel (0) target = $region17
    $region16: #{tpu_custom_call.1} parent=1 // pred_region
      _
    $region17: #{tpu_custom_call.1} parent=1 // pred_fallthru
      _
    // Predicated region
    $region18: #{tpu_custom_call.1} parent=1 // pred_check
      _
    $region19: #{tpu_custom_call.1} parent=1 // pred_check_branch
      %39 = sbr.rel (0) target = $region21
    $region20: #{tpu_custom_call.1} parent=1 // pred_region
      %41 = dma.done [#allocation3], 128
    $region21: #{tpu_custom_call.1} parent=1 // pred_fallthru
      _
    // Predicated region
    $region22: #{tpu_custom_call.1} parent=1 // pred_check
      _
    $region23: #{tpu_custom_call.1} parent=1 // pred_check_branch
      %43 = sbr.rel (0) target = $region25
    $region24: #{tpu_custom_call.1} parent=1 // pred_region
      %45 = dma.done [#allocation6], 16
    $region25: #{tpu_custom_call.1} parent=1 // pred_fallthru
      _
    %v46 = vld [vmem:[#allocation2] sm:$0xff]
    %v47 = vld [vmem:[%s3] sm:$0x1]
    %v49 = vperm.slane %v47, 0
    %v51 = vadd.f32 %v46, %v49
    %vm52 = vcmp.ge.f32.partialorder %v51, 0.0
    %v53 = vld [vmem:[#allocation5] sm:$0x1]
    %v54 = vld [vmem:[%s2] sm:$0x1]
    %v56 = vperm.slane %v53, 0
    %v59 = vperm.slane %v54, 0
    %v61 = vsel %vm52, %v56, %v59
    %v62 = vmul.f32 %v51, %v61
    %63 = vst [vmem:[#allocation7] sm:$0xff] %v62
    // Predicated region
    $region26: #{tpu_custom_call.1} parent=1 // pred_check
      _
    $region27: #{tpu_custom_call.1} parent=1 // pred_check_branch
      %65 = sbr.rel (0) target = $region29
    $region28: #{tpu_custom_call.1} parent=1 // pred_region
      %67 = vsyncadd [#allocation4], 0
      %s69 = sshll.u32 [#allocation7], 4
      %s70 = int_to_ptr.vmem [resolvable:$true] %s69
      %s71 = sshll.u32 %s4, 4
      %s72 = int_to_ptr.hbm [resolvable:$true] %s71
      %74 = dma.vmem_to_hbm [thread:$0]  %s70, 128, %s72, [#allocation4]
    $region29: #{tpu_custom_call.1} parent=1 // pred_fallthru
      _
    // Predicated region
    $region30: #{tpu_custom_call.1} parent=1 // pred_check
      _
    $region31: #{tpu_custom_call.1} parent=1 // pred_check_branch
      %76 = sbr.rel (0) target = $region33
    $region32: #{tpu_custom_call.1} parent=1 // pred_region
      %78 = dma.done [#allocation4], 128
    $region33: #{tpu_custom_call.1} parent=1 // pred_fallthru
      _
    %79 = vsyncpa [#allocation3], 1
    %80 = vsyncpa [#allocation6], 1
    %81 = vsyncpa [#allocation4], 1

</llo_original>
